<compile_context>
chip_gen: v7x
topology: tpu7x:2x2x1
jax: 0.10.0
libtpu: 0.0.40
codegen_flags: <defaults>
</compile_context>

<pallas_src>
import jax
import jax.numpy as jnp
from jax import lax
from jax.experimental import pallas as pl
from jax.experimental.pallas import tpu as pltpu


def _round_up(a, b):
    return (a + b - 1) // b * b


# ----------------------------------------------------------------------------
# Fast path: whole problem in one VMEM block, single kernel invocation.
# ----------------------------------------------------------------------------
def _fused_small_kernel(x_ref, w_ref, b_ref, other_ref, o_ref):
    # x: (B, IN), w: (OUT, IN) (PyTorch layout) -> contract along IN directly.
    acc = lax.dot_general(
        x_ref[...],
        w_ref[...],
        dimension_numbers=(((1,), (1,)), ((), ())),
        preferred_element_type=jnp.float32,
    )
    o_ref[...] = (acc + b_ref[...] + other_ref[...]).astype(o_ref.dtype)


# ----------------------------------------------------------------------------
# Tiled path (scaled shapes): single-k variant (no scratch) and multi-k variant.
# ----------------------------------------------------------------------------
def _tiled_nk1_kernel(x_ref, wt_ref, b_ref, other_ref, o_ref):
    acc = jnp.dot(x_ref[...], wt_ref[...], preferred_element_type=jnp.float32)
    o_ref[...] = (acc + b_ref[...] + other_ref[...]).astype(o_ref.dtype)


def _tiled_acc_kernel(x_ref, wt_ref, b_ref, other_ref, o_ref, acc_ref):
    k = pl.program_id(2)

    @pl.when(k == 0)
    def _init():
        acc_ref[...] = jnp.zeros_like(acc_ref)

    acc_ref[...] += jnp.dot(x_ref[...], wt_ref[...],
                            preferred_element_type=jnp.float32)

    @pl.when(k == pl.num_programs(2) - 1)
    def _epilogue():
        o_ref[...] = (acc_ref[...] + b_ref[...] + other_ref[...]).astype(o_ref.dtype)


def _linear_add_tiled(x, weight, bias2d, other2d, B, IN, OUT):
    # One-time parameter-layout transpose: (OUT, IN) -> (IN, OUT) so the kernel
    # contraction is plain NN matmul (no per-step weight transpose on the XLU).
    wt = weight.T

    tm = min(_round_up(B, 8), 256)
    tn = min(_round_up(OUT, 128), 512)
    tk = min(_round_up(IN, 128), 512)
    Mp, Np, Kp = _round_up(B, tm), _round_up(OUT, tn), _round_up(IN, tk)

    # Pad only when a dimension is not already tile-aligned.
    if (Mp, Kp) != (B, IN):
        x = jnp.pad(x, ((0, Mp - B), (0, Kp - IN)))
    if (Kp, Np) != (IN, OUT):
        wt = jnp.pad(wt, ((0, Kp - IN), (0, Np - OUT)))
    if Np != OUT:
        bias2d = jnp.pad(bias2d, ((0, 0), (0, Np - OUT)))
        other2d = jnp.pad(other2d, ((0, 0), (0, Np - OUT)))

    nm, nn, nk = Mp // tm, Np // tn, Kp // tk

    # Advisory cost estimate from LOGICAL shapes (not padded ones).
    cost = pl.CostEstimate(
        flops=2 * B * IN * OUT,
        transcendentals=0,
        bytes_accessed=4 * (B * IN + IN * OUT + 2 * OUT + B * OUT),
    )

    if nk == 1:
        out_p = pl.pallas_call(
            _tiled_nk1_kernel,
            out_shape=jax.ShapeDtypeStruct((Mp, Np), x.dtype),
            grid_spec=pltpu.PrefetchScalarGridSpec(
                num_scalar_prefetch=0,
                grid=(nm, nn),
                in_specs=[
                    pl.BlockSpec((tm, Kp), lambda i, j: (i, 0)),
                    pl.BlockSpec((Kp, tn), lambda i, j: (0, j)),
                    pl.BlockSpec((1, tn), lambda i, j: (0, j)),
                    pl.BlockSpec((1, tn), lambda i, j: (0, j)),
                ],
                out_specs=pl.BlockSpec((tm, tn), lambda i, j: (i, j)),
            ),
            compiler_params=pltpu.CompilerParams(
                dimension_semantics=("parallel", "parallel"),
                vmem_limit_bytes=32 * 1024 * 1024,
            ),
            cost_estimate=cost,
        )(x, wt, bias2d, other2d)
    else:
        out_p = pl.pallas_call(
            _tiled_acc_kernel,
            out_shape=jax.ShapeDtypeStruct((Mp, Np), x.dtype),
            grid_spec=pltpu.PrefetchScalarGridSpec(
                num_scalar_prefetch=0,
                grid=(nm, nn, nk),
                in_specs=[
                    pl.BlockSpec((tm, tk), lambda i, j, k: (i, k)),
                    pl.BlockSpec((tk, tn), lambda i, j, k: (k, j)),
                    pl.BlockSpec((1, tn), lambda i, j, k: (0, j)),
                    pl.BlockSpec((1, tn), lambda i, j, k: (0, j)),
                ],
                out_specs=pl.BlockSpec((tm, tn), lambda i, j, k: (i, j)),
                scratch_shapes=[pltpu.VMEM((tm, tn), jnp.float32)],
            ),
            compiler_params=pltpu.CompilerParams(
                dimension_semantics=("parallel", "parallel", "arbitrary"),
                vmem_limit_bytes=32 * 1024 * 1024,
            ),
            cost_estimate=cost,
        )(x, wt, bias2d, other2d)

    if (Mp, Np) != (B, OUT):
        out_p = out_p[:B, :OUT]
    return out_p


@jax.jit
def linear_add(x, weight, bias, other):
    """Computes Linear(x) + other == x @ weight.T + bias + other.

    x:      (B, IN)    float32
    weight: (OUT, IN)  float32  (PyTorch nn.Linear layout)
    bias:   (OUT,)     float32
    other:  (1, OUT)   float32  (broadcast over batch)
    """
    B, IN = x.shape
    OUT = weight.shape[0]

    bias2d = bias.reshape(1, OUT)
    other2d = other.reshape(1, OUT)

    # Fast path: everything fits comfortably in VMEM as whole-array blocks.
    if B <= 512 and IN <= 1024 and OUT <= 1024:
        cost = pl.CostEstimate(
            flops=2 * B * IN * OUT,
            transcendentals=0,
            bytes_accessed=4 * (B * IN + IN * OUT + 2 * OUT + B * OUT),
        )
        return pl.pallas_call(
            _fused_small_kernel,
            out_shape=jax.ShapeDtypeStruct((B, OUT), x.dtype),
            in_specs=[pl.BlockSpec(memory_space=pltpu.MemorySpace.VMEM)] * 4,
            out_specs=pl.BlockSpec(memory_space=pltpu.MemorySpace.VMEM),
            cost_estimate=cost,
        )(x, weight, bias2d, other2d)

    # Scaled-shape path.
    return _linear_add_tiled(x, weight, bias2d, other2d, B, IN, OUT)


if __name__ == "__main__":
    key = jax.random.PRNGKey(0)
    k_x, k_w, k_b, k_o = jax.random.split(key, 4)

    # Shapes implied by the module: nn.Linear(10, 10), x (1, 10), other (1, 10).
    B, IN, OUT = 1, 10, 10
    x = jax.random.normal(k_x, (B, IN), dtype=jnp.float32)
    weight = jax.random.normal(k_w, (OUT, IN), dtype=jnp.float32) * 0.1
    bias = jax.random.normal(k_b, (OUT,), dtype=jnp.float32) * 0.1
    other = jax.random.normal(k_o, (1, OUT), dtype=jnp.float32)

    out = linear_add(x, weight, bias, other)
    jax.block_until_ready(out)

    # Reference check in plain JAX (matches the PyTorch forward).
    ref = x @ weight.T + bias + other
    assert out.shape == ref.shape, f"shape mismatch: {out.shape} vs {ref.shape}"
    assert jnp.allclose(out, ref, atol=1e-5, rtol=1e-5), "mismatch vs reference"

    print("KERNEL_OK")
</pallas_src>

<mosaic_0001>
module attributes {stable_mosaic.version = 11 : i64} {
  func.func @_fused_small_kernel(%arg0: memref<1x10xf32, #tpu.memory_space<vmem>>, %arg1: memref<10x10xf32, #tpu.memory_space<vmem>>, %arg2: memref<1x10xf32, #tpu.memory_space<vmem>>, %arg3: memref<1x10xf32, #tpu.memory_space<vmem>>, %arg4: memref<1x10xf32, #tpu.memory_space<vmem>>) attributes {dimension_semantics = [], scalar_prefetch = 0 : i64, scratch_operands = 0 : i64, tpu.core_type = #tpu.core_type<tc>} {
    %c0 = arith.constant 0 : index
    %c0_0 = arith.constant 0 : index
    %0 = vector.load %arg0[%c0, %c0_0] : memref<1x10xf32, #tpu.memory_space<vmem>>, vector<1x10xf32>
    %c0_1 = arith.constant 0 : index
    %c0_2 = arith.constant 0 : index
    %1 = vector.load %arg1[%c0_1, %c0_2] : memref<10x10xf32, #tpu.memory_space<vmem>>, vector<10x10xf32>
    %cst = arith.constant dense<0.000000e+00> : vector<1x10xf32>
    %2 = tpu.matmul %0, %1, %cst {dimension_numbers = #tpu.dot_dimension_numbers<[1], [1], [0], [0], [0, 0, 1, 0], [], []>} : vector<1x10xf32>, vector<10x10xf32>, vector<1x10xf32> -> vector<1x10xf32>
    %c0_3 = arith.constant 0 : index
    %c0_4 = arith.constant 0 : index
    %3 = vector.load %arg2[%c0_3, %c0_4] : memref<1x10xf32, #tpu.memory_space<vmem>>, vector<1x10xf32>
    %4 = arith.addf %2, %3 : vector<1x10xf32>
    %c0_5 = arith.constant 0 : index
    %c0_6 = arith.constant 0 : index
    %5 = vector.load %arg3[%c0_5, %c0_6] : memref<1x10xf32, #tpu.memory_space<vmem>>, vector<1x10xf32>
    %6 = arith.addf %4, %5 : vector<1x10xf32>
    %c0_7 = arith.constant 0 : index
    %c0_8 = arith.constant 0 : index
    %7 = vector.load %arg4[%c0_7, %c0_8] : memref<1x10xf32, #tpu.memory_space<vmem>>, vector<1x10xf32>
    tpu.vector_store %arg4[%c0_7, %c0_8], %6 {strides = array<i32>} : memref<1x10xf32, #tpu.memory_space<vmem>>, vector<1x10xf32>,
    return
  }
}

</mosaic_0001>

<llo_original>
// kernel: linear_add.1
$region0: #{linear_add.1}
  #allocation0 [shape = 'u32[]', space=smem, size = 0x4, offset = 0x4, fixed_abs, tag = 'smem constant byte address 0x4 - core index']
  #allocation1 [shape = 'u32[144,128]{1,0:T(1,128)}', space=vmem, size = 0x12000, scoped, tag = 'internal scratch']
  %s0 = inlined_call_operand.vmem [shape: f32[1,10], index: 0, kind: input, shape index: {}]
  %s1 = inlined_call_operand.hbm [shape: f32[10,10], index: 1, kind: input, shape index: {}]
  %s2 = inlined_call_operand.vmem [shape: f32[1,10], index: 2, kind: input, shape index: {}]
  %s3 = inlined_call_operand.vmem [shape: f32[1,10], index: 3, kind: input, shape index: {}]
  %s4 = inlined_call_operand.hbm [shape: f32[1,10], index: 4, kind: output, shape index: {}]
  %s5 = sld [smem:[#allocation0]]
  $region30: #{linear_add.1} parent=0
    _
  %s7 = ssub.s32 1, %s5
  %s8 = scalar_select 0, %s7, %s5
  $region1: #{linear_add.1} parent=0
    #allocation2 [shape = 'u8[8192]{0}', space=vmem, size = 0x2000, scoped, tag = 'input window, operand 1, single buffered']
    #allocation3 [shape = 's32[1]{0}', space=sflag, size = 0x4, scoped, tag = 'scoped memory for linear_add.1']
    #allocation4 [shape = 's32[1]{0}', space=sflag, size = 0x4, scoped, tag = 'scoped memory for linear_add.1']
    #allocation5 [shape = 'u8[512]{0}', space=vmem, size = 0x400, scoped, tag = 'output window, operand 0, single buffered']
    %9 = vsyncpa [#allocation3], 0
    %10 = vsyncpa [#allocation4], 0
    // Predicated region
    $region2: #{linear_add.1} parent=1 // pred_check
      _
    $region3: #{linear_add.1} parent=1 // pred_check_branch
      %12 = sbr.rel (0) target = $region5
    $region4: #{linear_add.1} parent=1 // pred_region
      _
    $region5: #{linear_add.1} parent=1 // pred_fallthru
      _
    // Predicated region
    $region6: #{linear_add.1} parent=1 // pred_check
      _
    $region7: #{linear_add.1} parent=1 // pred_check_branch
      %14 = sbr.rel (0) target = $region9
    $region8: #{linear_add.1} parent=1 // pred_region
      %s16 = ssub.s32 256, 256
      %17 = vsyncadd [#allocation3], %s16
      %s18 = sshll.u32 [#allocation2], 4
      %s19 = int_to_ptr.vmem [resolvable:$true] %s18
      %24 = dma.hbm_to_vmem [thread:$0]  %s1, 256, %s19, [#allocation3], 128, 128, 8
    $region9: #{linear_add.1} parent=1 // pred_fallthru
      _
    // Predicated region
    $region10: #{linear_add.1} parent=1 // pred_check
      _
    $region11: #{linear_add.1} parent=1 // pred_check_branch
      %26 = sbr.rel (0) target = $region13
    $region12: #{linear_add.1} parent=1 // pred_region
      _
    $region13: #{linear_add.1} parent=1 // pred_fallthru
      _
    // Predicated region
    $region14: #{linear_add.1} parent=1 // pred_check
      _
    $region15: #{linear_add.1} parent=1 // pred_check_branch
      %28 = sbr.rel (0) target = $region17
    $region16: #{linear_add.1} parent=1 // pred_region
      _
    $region17: #{linear_add.1} parent=1 // pred_fallthru
      _
    // Predicated region
    $region18: #{linear_add.1} parent=1 // pred_check
      _
    $region19: #{linear_add.1} parent=1 // pred_check_branch
      %30 = sbr.rel (0) target = $region21
    $region20: #{linear_add.1} parent=1 // pred_region
      %31 = dma.done [#allocation3], 256
    $region21: #{linear_add.1} parent=1 // pred_fallthru
      _
    %v32 = vld [vmem:[%s0] sm:$0x1]
    %v33 = vld [vmem:[#allocation2] sm:$0xff]
    %v34 = vld [vmem:[#allocation2 + $0x8] sm:$0x3]
    %v35 = vld [vmem:[%s2] sm:$0x1]
    %vm36 = vcmask 80896
    %v38 = vsel %vm36, %v32, 0
    %v41 = vsel %vm36, %v33, 0
    %v44 = vsel %vm36, %v34, 0
    %46 = vmatprep.subr.mxu0 0.0
    %47 = vmatpush1.xpose.msra.mxu0 %v41
    %48 = vmatprep.subr.mxu0 0.0
    %49 = vmatpush1.xpose.msra.mxu0 %v44
    %50 = vmatprep.subr.mxu0 0.0
    %51 = vmatpush1.xpose.msra.mxu0 0.0
    %52 = vmatprep.subr.mxu0 0.0
    %53 = vmatpush1.xpose.msra.mxu0 0.0
    %54 = vmatprep.subr.mxu0 0.0
    %55 = vmatpush1.xpose.msra.mxu0 0.0
    %56 = vmatprep.subr.mxu0 0.0
    %57 = vmatpush1.xpose.msra.mxu0 0.0
    %58 = vmatprep.subr.mxu0 0.0
    %59 = vmatpush1.xpose.msra.mxu0 0.0
    %60 = vmatprep.subr.mxu0 0.0
    %61 = vmatpush1.xpose.msra.mxu0 0.0
    %62 = vmatprep.subr.mxu0 0.0
    %63 = vmatpush1.xpose.msra.mxu0 0.0
    %64 = vmatprep.subr.mxu0 0.0
    %65 = vmatpush1.xpose.msra.mxu0 0.0
    %66 = vmatprep.subr.mxu0 0.0
    %67 = vmatpush1.xpose.msra.mxu0 0.0
    %68 = vmatprep.subr.mxu0 0.0
    %69 = vmatpush1.xpose.msra.mxu0 0.0
    %70 = vmatprep.subr.mxu0 0.0
    %71 = vmatpush1.xpose.msra.mxu0 0.0
    %72 = vmatprep.subr.mxu0 0.0
    %73 = vmatpush1.xpose.msra.mxu0 0.0
    %74 = vmatprep.subr.mxu0 0.0
    %75 = vmatpush1.xpose.msra.mxu0 0.0
    %76 = vmatprep.subr.mxu0 0.0
    %77 = vmatpush1.xpose.msra.mxu0 0.0
    %78 = vmatprep.subr.mxu0 0.0
    %79 = vmatpush1.xpose.msra.mxu0 0.0
    %80 = vmatprep.subr.mxu0 0.0
    %81 = vmatpush1.xpose.msra.mxu0 0.0
    %82 = vmatprep.subr.mxu0 0.0
    %83 = vmatpush1.xpose.msra.mxu0 0.0
    %84 = vmatprep.subr.mxu0 0.0
    %85 = vmatpush1.xpose.msra.mxu0 0.0
    %86 = vmatprep.subr.mxu0 0.0
    %87 = vmatpush1.xpose.msra.mxu0 0.0
    %88 = vmatprep.subr.mxu0 0.0
    %89 = vmatpush1.xpose.msra.mxu0 0.0
    %90 = vmatprep.subr.mxu0 0.0
    %91 = vmatpush1.xpose.msra.mxu0 0.0
    %92 = vmatprep.subr.mxu0 0.0
    %93 = vmatpush1.xpose.msra.mxu0 0.0
    %94 = vmatprep.subr.mxu0 0.0
    %95 = vmatpush1.xpose.msra.mxu0 0.0
    %96 = vmatprep.subr.mxu0 0.0
    %97 = vmatpush1.xpose.msra.mxu0 0.0
    %98 = vmatprep.subr.mxu0 0.0
    %99 = vmatpush1.xpose.msra.mxu0 0.0
    %100 = vmatprep.subr.mxu0 0.0
    %101 = vmatpush1.xpose.msra.mxu0 0.0
    %102 = vmatprep.subr.mxu0 0.0
    %103 = vmatpush1.xpose.msra.mxu0 0.0
    %104 = vmatprep.subr.mxu0 0.0
    %105 = vmatpush1.xpose.msra.mxu0 0.0
    %106 = vmatprep.subr.mxu0 0.0
    %107 = vmatpush1.xpose.msra.mxu0 0.0
    %108 = vmatprep.subr.mxu0 0.0
    %109 = vmatpush1.xpose.msra.mxu0 0.0
    %110 = vmatprep.mubr.f32.mxu0 0.0
    %111 = vmatmul.mubr.f32.gmra.mrb[0].mxu0 %v38
    %v112 = vpop.f32.mrb[0].mxu0
    %v113 = vadd.f32 %v35, %v112
    %v114 = vpop.f32.mrb[0].mxu0
    %115 = vdwg.mxu0
    %v116 = vld [vmem:[%s3] sm:$0x1]
    %v117 = vadd.f32 %v113, %v116
    %vm118 = vcmask 73728
    %119 = vst.msk [vmem:[#allocation5] sm:$0x1] %vm118, %v117
    // Predicated region
    $region22: #{linear_add.1} parent=1 // pred_check
      _
    $region23: #{linear_add.1} parent=1 // pred_check_branch
      %121 = sbr.rel (0) target = $region25
    $region24: #{linear_add.1} parent=1 // pred_region
      %s123 = ssub.s32 16, 16
      %124 = vsyncadd [#allocation4], %s123
      %s126 = sshll.u32 [#allocation5], 4
      %s127 = int_to_ptr.vmem [resolvable:$true] %s126
      %129 = dma.vmem_to_hbm [thread:$0]  %s127, 16, %s4, [#allocation4]
    $region25: #{linear_add.1} parent=1 // pred_fallthru
      _
    // Predicated region
    $region26: #{linear_add.1} parent=1 // pred_check
      _
    $region27: #{linear_add.1} parent=1 // pred_check_branch
      %131 = sbr.rel (0) target = $region29
    $region28: #{linear_add.1} parent=1 // pred_region
      %132 = dma.done [#allocation4], 16
    $region29: #{linear_add.1} parent=1 // pred_fallthru
      _
    %133 = vsyncpa [#allocation3], 1
    %134 = vsyncpa [#allocation4], 1

</llo_original>
